<compile_context>
chip_gen: v7x
topology: tpu7x:2x2x1
jax: 0.10.0
libtpu: 0.0.40
codegen_flags: <defaults>
</compile_context>

<pallas_src>
import jax
import jax.numpy as jnp
from jax.experimental import pallas as pl
from jax.experimental.pallas import tpu as pltpu

BN_EPS = 1e-5


def _round_up(a, b):
    return (a + b - 1) // b * b


def mapimage_kernel(x_ref, w_ref, b_ref, o_ref):
    # x_ref: (TM, C)  tile of pixels
    # w_ref: (C, K)   BN-folded weight (resident)
    # b_ref: (1, K)   BN-folded bias   (resident)
    # o_ref: (TM, K)
    y = jnp.dot(x_ref[...], w_ref[...], preferred_element_type=jnp.float32)
    o_ref[...] = (y + b_ref[...]).astype(o_ref.dtype)


def mapimage_forward(x, w_ck, gamma, beta, image_size=(16, 16), tm=2048, out_dtype=None):
    """x: (B, H, W, C) channels-last. Returns (B, H, W, imH, imW)."""
    B, H, W, C = x.shape
    K = image_size[0] * image_size[1]
    M = B * H * W
    out_dtype = out_dtype or x.dtype

    x2 = x.reshape(M, C)

    # --- Fold BatchNorm (training-mode batch stats) into weight/bias, all in f32.
    # mean_k = x̄ · w_k ;  var_k = w_kᵀ Cov(x) w_k with a *centered* (C,C) covariance
    # (avoids E[y²]-mean² cancellation). These reductions touch only M*C elements.
    xf = x2.astype(jnp.float32)
    wf = w_ck.astype(jnp.float32)
    colmean = jnp.mean(xf, axis=0, keepdims=True)                      # (1, C)
    xc = xf - colmean
    cov = jnp.dot(xc.T, xc) / jnp.float32(M)                           # (C, C), biased (matches BN)
    mean_k = jnp.dot(colmean, wf)                                      # (1, K)
    var_k = jnp.sum(jnp.dot(cov, wf) * wf, axis=0, keepdims=True)      # (1, K)
    inv = jax.lax.rsqrt(var_k + BN_EPS)
    scale = gamma.reshape(1, K).astype(jnp.float32) * inv              # (1, K)
    w_fused = (wf * scale).astype(x.dtype)                             # (C, K) in compute dtype
    b_fused = beta.reshape(1, K).astype(jnp.float32) - mean_k * scale  # (1, K) f32
    # TODO(synk): BatchNorm running-stat update (training-time side effect) is
    # stateful and not reproduced; mean_k/var_k are available here if needed.

    # --- Tile M; pad to a multiple of TM (padded rows sliced off afterwards;
    # BN stats above were computed on the unpadded data, so padding is inert).
    tm = min(tm, _round_up(M, 8))
    Mp = _round_up(M, tm)
    if Mp != M:
        x2 = jnp.pad(x2, ((0, Mp - M), (0, 0)))

    out = pl.pallas_call(
        mapimage_kernel,
        out_shape=jax.ShapeDtypeStruct((Mp, K), out_dtype),
        grid_spec=pltpu.PrefetchScalarGridSpec(
            num_scalar_prefetch=0,
            grid=(Mp // tm,),                                  # stream over pixel tiles
            in_specs=[
                pl.BlockSpec((tm, C), lambda i: (i, 0)),       # pixel tile
                pl.BlockSpec((C, K), lambda i: (0, 0)),        # folded weight (resident)
                pl.BlockSpec((1, K), lambda i: (0, 0)),        # folded bias  (resident)
            ],
            out_specs=pl.BlockSpec((tm, K), lambda i: (i, 0)), # full-K lane-dense output
        ),
        compiler_params=pltpu.CompilerParams(
            dimension_semantics=("parallel",)),                # pipelined / megacore-shardable
    )(x2, w_fused, b_fused)

    out = out[:M]
    # (M, K) -> (B, H, W, imH, imW): same data arrangement as torch's
    # view(B, imH, imW, H, W).permute(0, 3, 4, 1, 2).
    return out.reshape(B, H, W, image_size[0], image_size[1])


def mapimage_ref(x, w_ck, gamma, beta, image_size=(16, 16)):
    """Pure-JAX reference: unfused matmul + batch-stat BatchNorm."""
    B, H, W, C = x.shape
    K = image_size[0] * image_size[1]
    y = jnp.einsum("bhwc,ck->bhwk", x.astype(jnp.float32), w_ck.astype(jnp.float32))
    yf = y.reshape(-1, K)
    mean = yf.mean(axis=0)
    var = jnp.mean(jnp.square(yf - mean), axis=0)
    yn = (yf - mean) / jnp.sqrt(var + BN_EPS) * gamma + beta
    return yn.reshape(B, H, W, image_size[0], image_size[1])


if __name__ == "__main__":
    key = jax.random.PRNGKey(0)
    kx, kw, kg, kb = jax.random.split(key, 4)

    # Small shapes consistent with the module: x is (B, H, W, C) channels-last.
    B, H, W, C = 2, 8, 8, 4
    image_size = (16, 16)
    K = image_size[0] * image_size[1]

    x = jax.random.normal(kx, (B, H, W, C), jnp.float32)

    # Conv3d weight in torch has shape (K, 1, C, 1, 1); only the (K, C) slice is
    # meaningful, stored here transposed as (C, K). Deterministic init.
    w_ck = jax.random.normal(kw, (C, K), jnp.float32) / jnp.sqrt(jnp.float32(C))
    # BatchNorm affine params (torch defaults gamma=1, beta=0; use non-trivial
    # deterministic values to exercise the affine path).
    gamma = 1.0 + 0.1 * jax.random.normal(kg, (K,), jnp.float32)
    beta = 0.1 * jax.random.normal(kb, (K,), jnp.float32)

    out = jax.block_until_ready(mapimage_forward(x, w_ck, gamma, beta, image_size))
    ref = mapimage_ref(x, w_ck, gamma, beta, image_size)

    assert out.shape == (B, H, W, image_size[0], image_size[1]), out.shape
    assert jnp.allclose(out, ref, atol=1e-4, rtol=1e-4), float(jnp.max(jnp.abs(out - ref)))
    print("KERNEL_OK")
</pallas_src>

<mosaic_0001>
module attributes {stable_mosaic.version = 11 : i64} {
  func.func @mapimage_kernel(%arg0: i32, %arg1: memref<128x4xf32, #tpu.memory_space<vmem>>, %arg2: memref<4x256xf32, #tpu.memory_space<vmem>>, %arg3: memref<1x256xf32, #tpu.memory_space<vmem>>, %arg4: memref<128x256xf32, #tpu.memory_space<vmem>>) attributes {dimension_semantics = [#tpu.dimension_semantics<parallel>], iteration_bounds = array<i64: 1>, scalar_prefetch = 0 : i64, scratch_operands = 0 : i64, tpu.core_type = #tpu.core_type<tc>, window_params = [{transform_indices = @transform_0, window_bounds = array<i64: 128, 4>}, {pipeline_mode = #tpu.pipeline_mode<synchronous>, transform_indices = @transform_1, window_bounds = array<i64: 4, 256>}, {pipeline_mode = #tpu.pipeline_mode<synchronous>, transform_indices = @transform_2, window_bounds = array<i64: 1, 256>}, {transform_indices = @transform_3, window_bounds = array<i64: 128, 256>}]} {
    %c0 = arith.constant 0 : index
    %c0_0 = arith.constant 0 : index
    %0 = vector.load %arg1[%c0, %c0_0] : memref<128x4xf32, #tpu.memory_space<vmem>>, vector<128x4xf32>
    %c0_1 = arith.constant 0 : index
    %c0_2 = arith.constant 0 : index
    %1 = vector.load %arg2[%c0_1, %c0_2] : memref<4x256xf32, #tpu.memory_space<vmem>>, vector<4x256xf32>
    %cst = arith.constant dense<0.000000e+00> : vector<128x256xf32>
    %2 = tpu.matmul %0, %1, %cst {dimension_numbers = #tpu.dot_dimension_numbers<[1], [0], [0], [1], [0, 0, 1, 1], [], []>} : vector<128x4xf32>, vector<4x256xf32>, vector<128x256xf32> -> vector<128x256xf32>
    %c0_3 = arith.constant 0 : index
    %c0_4 = arith.constant 0 : index
    %3 = vector.load %arg3[%c0_3, %c0_4] : memref<1x256xf32, #tpu.memory_space<vmem>>, vector<1x256xf32>
    %4 = vector.broadcast %3 : vector<1x256xf32> to vector<128x256xf32>
    %5 = arith.addf %2, %4 : vector<128x256xf32>
    %c0_5 = arith.constant 0 : index
    %c0_6 = arith.constant 0 : index
    %6 = vector.load %arg4[%c0_5, %c0_6] : memref<128x256xf32, #tpu.memory_space<vmem>>, vector<128x256xf32>
    tpu.vector_store %arg4[%c0_5, %c0_6], %5 {strides = array<i32>} : memref<128x256xf32, #tpu.memory_space<vmem>>, vector<128x256xf32>,
    return
  }
  func.func @transform_0(%arg0: i32) -> (i32, i32) {
    %c0_i32 = arith.constant 0 : i32
    %c0_i32_0 = arith.constant 0 : i32
    return %arg0, %c0_i32 : i32, i32
  }
  func.func @transform_1(%arg0: i32) -> (i32, i32) {
    %c0_i32 = arith.constant 0 : i32
    %c0_i32_0 = arith.constant 0 : i32
    %c0_i32_1 = arith.constant 0 : i32
    return %c0_i32, %c0_i32_0 : i32, i32
  }
  func.func @transform_2(%arg0: i32) -> (i32, i32) {
    %c0_i32 = arith.constant 0 : i32
    %c0_i32_0 = arith.constant 0 : i32
    %c0_i32_1 = arith.constant 0 : i32
    return %c0_i32, %c0_i32_0 : i32, i32
  }
  func.func @transform_3(%arg0: i32) -> (i32, i32) {
    %c0_i32 = arith.constant 0 : i32
    %c0_i32_0 = arith.constant 0 : i32
    return %arg0, %c0_i32 : i32, i32
  }
}

</mosaic_0001>

<llo_original>
// kernel: tpu_custom_call.1
$region0: #{tpu_custom_call.1}
  #allocation0 [shape = 'u32[]', space=smem, size = 0x4, offset = 0x4, fixed_abs, tag = 'smem constant byte address 0x4 - core index']
  #allocation1 [shape = 'u32[144,128]{1,0:T(1,128)}', space=vmem, size = 0x12000, scoped, tag = 'internal scratch']
  %s0 = inlined_call_operand.vmem [shape: f32[128,4], index: 0, kind: input, shape index: {}]
  %s1 = inlined_call_operand.vmem [shape: f32[4,256], index: 1, kind: input, shape index: {}]
  %s2 = inlined_call_operand.vmem [shape: f32[1,256], index: 2, kind: input, shape index: {}]
  %s3 = inlined_call_operand.hbm [shape: f32[128,256], index: 3, kind: output, shape index: {}]
  %s4 = sld [smem:[#allocation0]]
  $region22: #{tpu_custom_call.1} parent=0
    _
  %s6 = ssub.s32 1, %s4
  %s7 = scalar_select 0, %s6, %s4
  $region1: #{tpu_custom_call.1} parent=0
    #allocation2 [shape = 'u8[131072]{0}', space=vmem, size = 0x20000, scoped, tag = 'output window, operand 0, single buffered']
    #allocation3 [shape = 's32[1]{0}', space=sflag, size = 0x4, scoped, tag = 'scoped memory for tpu_custom_call.1']
    %8 = vsyncpa [#allocation3], 0
    // Predicated region
    $region2: #{tpu_custom_call.1} parent=1 // pred_check
      _
    $region3: #{tpu_custom_call.1} parent=1 // pred_check_branch
      %10 = sbr.rel (0) target = $region5
    $region4: #{tpu_custom_call.1} parent=1 // pred_region
      _
    $region5: #{tpu_custom_call.1} parent=1 // pred_fallthru
      _
    // Predicated region
    $region6: #{tpu_custom_call.1} parent=1 // pred_check
      _
    $region7: #{tpu_custom_call.1} parent=1 // pred_check_branch
      %12 = sbr.rel (0) target = $region9
    $region8: #{tpu_custom_call.1} parent=1 // pred_region
      _
    $region9: #{tpu_custom_call.1} parent=1 // pred_fallthru
      _
    // Predicated region
    $region10: #{tpu_custom_call.1} parent=1 // pred_check
      _
    $region11: #{tpu_custom_call.1} parent=1 // pred_check_branch
      %14 = sbr.rel (0) target = $region13
    $region12: #{tpu_custom_call.1} parent=1 // pred_region
      _
    $region13: #{tpu_custom_call.1} parent=1 // pred_fallthru
      _
    %v15 = vld [vmem:[%s0] sm:$0xff]
    %v16 = vld [vmem:[%s0 + $0x8] sm:$0xff]
    %v17 = vld [vmem:[%s0 + $0x10] sm:$0xff]
    %v18 = vld [vmem:[%s0 + $0x18] sm:$0xff]
    %v19 = vld [vmem:[%s0 + $0x20] sm:$0xff]
    %v20 = vld [vmem:[%s0 + $0x28] sm:$0xff]
    %v21 = vld [vmem:[%s0 + $0x30] sm:$0xff]
    %v22 = vld [vmem:[%s0 + $0x38] sm:$0xff]
    %v23 = vld [vmem:[%s0 + $0x40] sm:$0xff]
    %v24 = vld [vmem:[%s0 + $0x48] sm:$0xff]
    %v25 = vld [vmem:[%s0 + $0x50] sm:$0xff]
    %v26 = vld [vmem:[%s0 + $0x58] sm:$0xff]
    %v27 = vld [vmem:[%s0 + $0x60] sm:$0xff]
    %v28 = vld [vmem:[%s0 + $0x68] sm:$0xff]
    %v29 = vld [vmem:[%s0 + $0x70] sm:$0xff]
    %v30 = vld [vmem:[%s0 + $0x78] sm:$0xff]
    %v31 = vld [vmem:[%s1] sm:$0xff]
    %v32 = vld [vmem:[%s2] sm:$0x3]
    %v34 = vlaneseq
    %v35 = vshrl.u32 %v34, 7
    %v36 = vsub.s32 0, %v35
    %v37 = vrot.slane %v32, %v36
    %v38 = vlaneseq
    %v39 = vshrl.u32 %v38, 7
    %v40 = vsub.s32 1, %v39
    %v41 = vrot.slane %v32, %v40
    %v45 = vcombine.high %v31, %v31
    %vm46 = vcmask 31744
    %v48 = vsel %vm46, %v15, 0
    %v51 = vsel %vm46, %v16, 0
    %v54 = vsel %vm46, %v17, 0
    %v57 = vsel %vm46, %v18, 0
    %v60 = vsel %vm46, %v19, 0
    %v63 = vsel %vm46, %v20, 0
    %v66 = vsel %vm46, %v21, 0
    %v69 = vsel %vm46, %v22, 0
    %v72 = vsel %vm46, %v23, 0
    %v75 = vsel %vm46, %v24, 0
    %v78 = vsel %vm46, %v25, 0
    %v81 = vsel %vm46, %v26, 0
    %v84 = vsel %vm46, %v27, 0
    %v87 = vsel %vm46, %v28, 0
    %v90 = vsel %vm46, %v29, 0
    %v93 = vsel %vm46, %v30, 0
    %vm95 = vcmask 1043456
    %v96 = vsel %vm95, %v31, 0
    %v98 = vsel %vm95, %v45, 0
    %100 = vmatprep.subr.mxu0 %v98
    %101 = vmatpush1.msra.mxu0 %v96
    %102 = vmatprep.subr.mxu0 0.0
    %103 = vmatpush1.msra.mxu0 0.0
    %104 = vmatprep.subr.mxu0 0.0
    %105 = vmatpush1.msra.mxu0 0.0
    %106 = vmatprep.subr.mxu0 0.0
    %107 = vmatpush1.msra.mxu0 0.0
    %108 = vmatprep.subr.mxu0 0.0
    %109 = vmatpush1.msra.mxu0 0.0
    %110 = vmatprep.subr.mxu0 0.0
    %111 = vmatpush1.msra.mxu0 0.0
    %112 = vmatprep.subr.mxu0 0.0
    %113 = vmatpush1.msra.mxu0 0.0
    %114 = vmatprep.subr.mxu0 0.0
    %115 = vmatpush1.msra.mxu0 0.0
    %116 = vmatprep.subr.mxu0 0.0
    %117 = vmatpush1.msra.mxu0 0.0
    %118 = vmatprep.subr.mxu0 0.0
    %119 = vmatpush1.msra.mxu0 0.0
    %120 = vmatprep.subr.mxu0 0.0
    %121 = vmatpush1.msra.mxu0 0.0
    %122 = vmatprep.subr.mxu0 0.0
    %123 = vmatpush1.msra.mxu0 0.0
    %124 = vmatprep.subr.mxu0 0.0
    %125 = vmatpush1.msra.mxu0 0.0
    %126 = vmatprep.subr.mxu0 0.0
    %127 = vmatpush1.msra.mxu0 0.0
    %128 = vmatprep.subr.mxu0 0.0
    %129 = vmatpush1.msra.mxu0 0.0
    %130 = vmatprep.subr.mxu0 0.0
    %131 = vmatpush1.msra.mxu0 0.0
    %132 = vmatprep.subr.mxu0 0.0
    %133 = vmatpush1.msra.mxu0 0.0
    %134 = vmatprep.subr.mxu0 0.0
    %135 = vmatpush1.msra.mxu0 0.0
    %136 = vmatprep.subr.mxu0 0.0
    %137 = vmatpush1.msra.mxu0 0.0
    %138 = vmatprep.subr.mxu0 0.0
    %139 = vmatpush1.msra.mxu0 0.0
    %140 = vmatprep.subr.mxu0 0.0
    %141 = vmatpush1.msra.mxu0 0.0
    %142 = vmatprep.subr.mxu0 0.0
    %143 = vmatpush1.msra.mxu0 0.0
    %144 = vmatprep.subr.mxu0 0.0
    %145 = vmatpush1.msra.mxu0 0.0
    %146 = vmatprep.subr.mxu0 0.0
    %147 = vmatpush1.msra.mxu0 0.0
    %148 = vmatprep.subr.mxu0 0.0
    %149 = vmatpush1.msra.mxu0 0.0
    %150 = vmatprep.subr.mxu0 0.0
    %151 = vmatpush1.msra.mxu0 0.0
    %152 = vmatprep.subr.mxu0 0.0
    %153 = vmatpush1.msra.mxu0 0.0
    %154 = vmatprep.subr.mxu0 0.0
    %155 = vmatpush1.msra.mxu0 0.0
    %156 = vmatprep.subr.mxu0 0.0
    %157 = vmatpush1.msra.mxu0 0.0
    %158 = vmatprep.subr.mxu0 0.0
    %159 = vmatpush1.msra.mxu0 0.0
    %160 = vmatprep.subr.mxu0 0.0
    %161 = vmatpush1.msra.mxu0 0.0
    %162 = vmatprep.subr.mxu0 0.0
    %163 = vmatpush1.msra.mxu0 0.0
    %164 = vmatprep.mubr.f32.mxu0 0.0
    %165 = vmatmul.mubr.f32.gmra.mrb[0].mxu0 %v48
    %v166 = vpop.f32.mrb[0].mxu0
    %v167 = vadd.f32 %v37, %v166
    %v168 = vpop.f32.mrb[0].mxu0
    %v169 = vadd.f32 %v41, %v168
    %170 = vmatprep.mubr.f32.mxu0 0.0
    %171 = vmatmul.mubr.f32.gmra.mrb[0].mxu0 %v51
    %v172 = vpop.f32.mrb[0].mxu0
    %v173 = vadd.f32 %v37, %v172
    %v174 = vpop.f32.mrb[0].mxu0
    %v175 = vadd.f32 %v41, %v174
    %176 = vmatprep.mubr.f32.mxu0 0.0
    %177 = vmatmul.mubr.f32.gmra.mrb[0].mxu0 %v54
    %v178 = vpop.f32.mrb[0].mxu0
    %v179 = vadd.f32 %v37, %v178
    %v180 = vpop.f32.mrb[0].mxu0
    %v181 = vadd.f32 %v41, %v180
    %182 = vmatprep.mubr.f32.mxu0 0.0
    %183 = vmatmul.mubr.f32.gmra.mrb[0].mxu0 %v57
    %v184 = vpop.f32.mrb[0].mxu0
    %v185 = vadd.f32 %v37, %v184
    %v186 = vpop.f32.mrb[0].mxu0
    %v187 = vadd.f32 %v41, %v186
    %188 = vmatprep.mubr.f32.mxu0 0.0
    %189 = vmatmul.mubr.f32.gmra.mrb[0].mxu0 %v60
    %v190 = vpop.f32.mrb[0].mxu0
    %v191 = vadd.f32 %v37, %v190
    %v192 = vpop.f32.mrb[0].mxu0
    %v193 = vadd.f32 %v41, %v192
    %194 = vmatprep.mubr.f32.mxu0 0.0
    %195 = vmatmul.mubr.f32.gmra.mrb[0].mxu0 %v63
    %v196 = vpop.f32.mrb[0].mxu0
    %v197 = vadd.f32 %v37, %v196
    %v198 = vpop.f32.mrb[0].mxu0
    %v199 = vadd.f32 %v41, %v198
    %200 = vmatprep.mubr.f32.mxu0 0.0
    %201 = vmatmul.mubr.f32.gmra.mrb[0].mxu0 %v66
    %v202 = vpop.f32.mrb[0].mxu0
    %v203 = vadd.f32 %v37, %v202
    %v204 = vpop.f32.mrb[0].mxu0
    %v205 = vadd.f32 %v41, %v204
    %206 = vmatprep.mubr.f32.mxu0 0.0
    %207 = vmatmul.mubr.f32.gmra.mrb[0].mxu0 %v69
    %v208 = vpop.f32.mrb[0].mxu0
    %v209 = vadd.f32 %v37, %v208
    %v210 = vpop.f32.mrb[0].mxu0
    %v211 = vadd.f32 %v41, %v210
    %212 = vmatprep.mubr.f32.mxu0 0.0
    %213 = vmatmul.mubr.f32.gmra.mrb[0].mxu0 %v72
    %v214 = vpop.f32.mrb[0].mxu0
    %v215 = vadd.f32 %v37, %v214
    %v216 = vpop.f32.mrb[0].mxu0
    %v217 = vadd.f32 %v41, %v216
    %218 = vmatprep.mubr.f32.mxu0 0.0
    %219 = vmatmul.mubr.f32.gmra.mrb[0].mxu0 %v75
    %v220 = vpop.f32.mrb[0].mxu0
    %v221 = vadd.f32 %v37, %v220
    %v222 = vpop.f32.mrb[0].mxu0
    %v223 = vadd.f32 %v41, %v222
    %224 = vmatprep.mubr.f32.mxu0 0.0
    %225 = vmatmul.mubr.f32.gmra.mrb[0].mxu0 %v78
    %v226 = vpop.f32.mrb[0].mxu0
    %v227 = vadd.f32 %v37, %v226
    %v228 = vpop.f32.mrb[0].mxu0
    %v229 = vadd.f32 %v41, %v228
    %230 = vmatprep.mubr.f32.mxu0 0.0
    %231 = vmatmul.mubr.f32.gmra.mrb[0].mxu0 %v81
    %v232 = vpop.f32.mrb[0].mxu0
    %v233 = vadd.f32 %v37, %v232
    %v234 = vpop.f32.mrb[0].mxu0
    %v235 = vadd.f32 %v41, %v234
    %236 = vmatprep.mubr.f32.mxu0 0.0
    %237 = vmatmul.mubr.f32.gmra.mrb[0].mxu0 %v84
    %v238 = vpop.f32.mrb[0].mxu0
    %v239 = vadd.f32 %v37, %v238
    %v240 = vpop.f32.mrb[0].mxu0
    %v241 = vadd.f32 %v41, %v240
    %242 = vmatprep.mubr.f32.mxu0 0.0
    %243 = vmatmul.mubr.f32.gmra.mrb[0].mxu0 %v87
    %v244 = vpop.f32.mrb[0].mxu0
    %v245 = vadd.f32 %v37, %v244
    %v246 = vpop.f32.mrb[0].mxu0
    %v247 = vadd.f32 %v41, %v246
    %248 = vmatprep.mubr.f32.mxu0 0.0
    %249 = vmatmul.mubr.f32.gmra.mrb[0].mxu0 %v90
    %v250 = vpop.f32.mrb[0].mxu0
    %v251 = vadd.f32 %v37, %v250
    %v252 = vpop.f32.mrb[0].mxu0
    %v253 = vadd.f32 %v41, %v252
    %254 = vmatprep.mubr.f32.mxu0 0.0
    %255 = vmatmul.mubr.f32.gmra.mrb[0].mxu0 %v93
    %v256 = vpop.f32.mrb[0].mxu0
    %v257 = vadd.f32 %v37, %v256
    %v258 = vpop.f32.mrb[0].mxu0
    %v259 = vadd.f32 %v41, %v258
    %260 = vdwg.mxu0
    %261 = vst [vmem:[#allocation2] sm:$0xff] %v167
    %262 = vst [vmem:[#allocation2 + $0x8] sm:$0xff] %v169
    %263 = vst [vmem:[#allocation2 + $0x10] sm:$0xff] %v173
    %264 = vst [vmem:[#allocation2 + $0x18] sm:$0xff] %v175
    %265 = vst [vmem:[#allocation2 + $0x20] sm:$0xff] %v179
    %266 = vst [vmem:[#allocation2 + $0x28] sm:$0xff] %v181
    %267 = vst [vmem:[#allocation2 + $0x30] sm:$0xff] %v185
    %268 = vst [vmem:[#allocation2 + $0x38] sm:$0xff] %v187
    %269 = vst [vmem:[#allocation2 + $0x40] sm:$0xff] %v191
    %270 = vst [vmem:[#allocation2 + $0x48] sm:$0xff] %v193
    %271 = vst [vmem:[#allocation2 + $0x50] sm:$0xff] %v197
    %272 = vst [vmem:[#allocation2 + $0x58] sm:$0xff] %v199
    %273 = vst [vmem:[#allocation2 + $0x60] sm:$0xff] %v203
    %274 = vst [vmem:[#allocation2 + $0x68] sm:$0xff] %v205
    %275 = vst [vmem:[#allocation2 + $0x70] sm:$0xff] %v209
    %276 = vst [vmem:[#allocation2 + $0x78] sm:$0xff] %v211
    %277 = vst [vmem:[#allocation2 + $0x80] sm:$0xff] %v215
    %278 = vst [vmem:[#allocation2 + $0x88] sm:$0xff] %v217
    %279 = vst [vmem:[#allocation2 + $0x90] sm:$0xff] %v221
    %280 = vst [vmem:[#allocation2 + $0x98] sm:$0xff] %v223
    %281 = vst [vmem:[#allocation2 + $0xa0] sm:$0xff] %v227
    %282 = vst [vmem:[#allocation2 + $0xa8] sm:$0xff] %v229
    %283 = vst [vmem:[#allocation2 + $0xb0] sm:$0xff] %v233
    %284 = vst [vmem:[#allocation2 + $0xb8] sm:$0xff] %v235
    %285 = vst [vmem:[#allocation2 + $0xc0] sm:$0xff] %v239
    %286 = vst [vmem:[#allocation2 + $0xc8] sm:$0xff] %v241
    %287 = vst [vmem:[#allocation2 + $0xd0] sm:$0xff] %v245
    %288 = vst [vmem:[#allocation2 + $0xd8] sm:$0xff] %v247
    %289 = vst [vmem:[#allocation2 + $0xe0] sm:$0xff] %v251
    %290 = vst [vmem:[#allocation2 + $0xe8] sm:$0xff] %v253
    %291 = vst [vmem:[#allocation2 + $0xf0] sm:$0xff] %v257
    %292 = vst [vmem:[#allocation2 + $0xf8] sm:$0xff] %v259
    // Predicated region
    $region14: #{tpu_custom_call.1} parent=1 // pred_check
      _
    $region15: #{tpu_custom_call.1} parent=1 // pred_check_branch
      %294 = sbr.rel (0) target = $region17
    $region16: #{tpu_custom_call.1} parent=1 // pred_region
      %s296 = ssub.s32 4096, 4096
      %297 = vsyncadd [#allocation3], %s296
      %s298 = sshll.u32 [#allocation2], 4
      %s299 = int_to_ptr.vmem [resolvable:$true] %s298
      %304 = dma.vmem_to_hbm [thread:$0]  %s299, 4096, %s3, [#allocation3], 256, 256, 16
    $region17: #{tpu_custom_call.1} parent=1 // pred_fallthru
      _
    // Predicated region
    $region18: #{tpu_custom_call.1} parent=1 // pred_check
      _
    $region19: #{tpu_custom_call.1} parent=1 // pred_check_branch
      %306 = sbr.rel (0) target = $region21
    $region20: #{tpu_custom_call.1} parent=1 // pred_region
      %307 = dma.done [#allocation3], 4096
    $region21: #{tpu_custom_call.1} parent=1 // pred_fallthru
      _
    %308 = vsyncpa [#allocation3], 1

</llo_original>
